<compile_context>
chip_gen: v5e
topology: v5e:2x2
jax: 0.10.0
libtpu: 0.0.40
codegen_flags: <defaults>
</compile_context>

<pallas_src>
import functools

import jax
import jax.numpy as jnp
from jax.experimental import pallas as pl
from jax.experimental.pallas import tpu as pltpu


def _round_up(n: int, m: int) -> int:
    return ((n + m - 1) // m) * m


def _pe_kernel(x_ref, o_ref, *, freq_bands, logscale, out_channels,
               pad_channels):
    """Positional encoding on one natural-layout row tile.

    x_ref: [T, C]             (T = row tile, multiple of 8; C = in_channels)
    o_ref: [T, out_channels]  (out_channels = C*(2F+1); natural row-major)

    Band order along the last output axis matches torch.cat(dim=-1):
      [x, sin(f0*x), cos(f0*x), sin(f1*x), cos(f1*x), ...]
    """
    x = x_ref[...].astype(jnp.float32)      # f32 math (no bf16 VPU/EUP on v5e)
    xt = jnp.transpose(x)                   # (C, T): lane-dense compute layout

    bands = [xt]
    s_prev = c_prev = None
    for k, f in enumerate(freq_bands):      # compile-time Python floats
        if logscale and (k % 2 == 1):
            # f_k == 2*f_{k-1} exactly; one double-angle step from the exact
            # anchor (never chained) -> abs error ~1e-6, halves EUP/VPU
            # transcendental work.
            s = 2.0 * s_prev * c_prev
            c = 1.0 - 2.0 * s_prev * s_prev
        else:
            a = f * xt
            s = jnp.sin(a)
            c = jnp.cos(a)
        bands.append(s)
        bands.append(c)
        s_prev, c_prev = s, c

    if pad_channels > out_channels:         # keep the big transpose 8-aligned
        bands.append(jnp.zeros((pad_channels - out_channels, xt.shape[1]),
                               jnp.float32))

    big = jnp.concatenate(bands, axis=0)    # (pad_channels, T), sublanes % 8
    out = jnp.transpose(big)                # (T, pad_channels): one in-kernel
                                            # transpose (XLU), no HBM traffic
    o_ref[...] = out[:, :out_channels].astype(o_ref.dtype)   # single store


def _auto_tile_rows(rows: int, cap: int = 16384, min_tile: int = 1024,
                    min_blocks: int = 8) -> int:
    """Row-tile choice: big enough to amortize ~0.35us/step, small enough to
    give >= min_blocks grid steps (v7x megacore) and fit scoped VMEM."""
    rows8 = _round_up(rows, 8)
    if rows8 <= min_tile:
        return rows8
    t = _round_up(pl.cdiv(rows, min_blocks), 8)
    return min(rows8, max(min_tile, min(cap, t)))


def make_embedding(in_channels: int, N_freqs: int, logscale: bool = True,
                   tile_rows=None):
    """Returns fn(x) matching torch `embedding(in_channels, N_freqs, logscale)`."""
    if logscale:
        freqs = 2.0 ** jnp.linspace(0.0, N_freqs - 1, N_freqs)
    else:
        freqs = jnp.linspace(1.0, 2.0 ** (N_freqs - 1), N_freqs)
    freq_bands = tuple(float(f) for f in freqs)           # bake as constants
    out_channels = in_channels * (2 * N_freqs + 1)
    pad_channels = _round_up(out_channels, 8)

    kernel = functools.partial(
        _pe_kernel, freq_bands=freq_bands, logscale=logscale,
        out_channels=out_channels, pad_channels=pad_channels)

    def forward(x):
        # x: (..., in_channels) -> (..., out_channels); dtype preserved.
        assert x.shape[-1] == in_channels
        lead = x.shape[:-1]
        rows = 1
        for d in lead:
            rows *= int(d)

        x2 = x.reshape(rows, in_channels)                  # free (row-major)

        tile = tile_rows if tile_rows is not None else _auto_tile_rows(rows)
        tile = max(8, _round_up(min(tile, _round_up(rows, 8)), 8))
        grid = (pl.cdiv(rows, tile),)                      # ragged last block
                                                           # handled by Pallas

        out2 = pl.pallas_call(
            kernel,
            out_shape=jax.ShapeDtypeStruct((rows, out_channels), x.dtype),
            grid_spec=pltpu.PrefetchScalarGridSpec(
                num_scalar_prefetch=0,
                grid=grid,
                in_specs=[pl.BlockSpec((tile, in_channels), lambda i: (i, 0))],
                out_specs=pl.BlockSpec((tile, out_channels), lambda i: (i, 0)),
            ),
            compiler_params=pltpu.CompilerParams(
                dimension_semantics=("parallel",),
                vmem_limit_bytes=32 * 1024 * 1024),
        )(x2)

        return out2.reshape(*lead, out_channels)           # free (row-major)

    return forward


def _reference(x, N_freqs, logscale=True):
    if logscale:
        freq_bands = 2.0 ** jnp.linspace(0.0, N_freqs - 1, N_freqs)
    else:
        freq_bands = jnp.linspace(1.0, 2.0 ** (N_freqs - 1), N_freqs)
    out = [x]
    for f in freq_bands:
        out.append(jnp.sin(f * x))
        out.append(jnp.cos(f * x))
    return jnp.concatenate(out, axis=-1)


if __name__ == "__main__":
    in_channels = 4
    N_freqs = 4
    batch, n_points = 2, 300                 # 600 rows

    key = jax.random.PRNGKey(0)
    x = jax.random.normal(key, (batch, n_points, in_channels),
                          dtype=jnp.float32)

    expected_shape = (batch, n_points, in_channels * (2 * N_freqs + 1))
    ref_log = _reference(x, N_freqs, logscale=True)
    ref_lin = _reference(x, N_freqs, logscale=False)

    # 1) forced small tile -> multi-block grid with a ragged last block
    #    (600 rows = 4 full 128-row blocks + 88-row tail).
    embed_small = make_embedding(in_channels, N_freqs, logscale=True,
                                 tile_rows=128)
    out_small = jax.block_until_ready(embed_small(x))
    assert out_small.shape == expected_shape, (out_small.shape, expected_shape)
    assert jnp.allclose(out_small, ref_log, atol=1e-5, rtol=1e-5), \
        "mismatch (small tile)"

    # 2) auto tile (single block at this size).
    embed = make_embedding(in_channels, N_freqs, logscale=True)
    out = jax.block_until_ready(embed(x))
    assert out.shape == expected_shape, (out.shape, expected_shape)
    assert jnp.allclose(out, ref_log, atol=1e-5, rtol=1e-5), \
        "mismatch (auto tile)"

    # 3) non-logscale path (exact sin/cos for every band).
    embed_lin = make_embedding(in_channels, N_freqs, logscale=False)
    out_lin = jax.block_until_ready(embed_lin(x))
    assert out_lin.shape == expected_shape, (out_lin.shape, expected_shape)
    assert jnp.allclose(out_lin, ref_lin, atol=1e-5, rtol=1e-5), \
        "mismatch (linscale)"

    print("KERNEL_OK")
</pallas_src>

<mosaic_0001>
module attributes {stable_mosaic.version = 11 : i64} {
  func.func @_pe_kernel(%arg0: i32, %arg1: memref<128x4xf32, #tpu.memory_space<vmem>>, %arg2: memref<128x36xf32, #tpu.memory_space<vmem>>) attributes {dimension_semantics = [#tpu.dimension_semantics<parallel>], iteration_bounds = array<i64: 5>, scalar_prefetch = 0 : i64, scratch_operands = 0 : i64, tpu.core_type = #tpu.core_type<tc>, window_params = [{transform_indices = @transform_0, window_bounds = array<i64: 128, 4>}, {transform_indices = @transform_1, window_bounds = array<i64: 128, 36>}]} {
    %c0 = arith.constant 0 : index
    %c0_0 = arith.constant 0 : index
    %0 = vector.load %arg1[%c0, %c0_0] : memref<128x4xf32, #tpu.memory_space<vmem>>, vector<128x4xf32>
    %1 = tpu.transpose %0, [1, 0] : vector<128x4xf32> -> vector<4x128xf32>
    %cst = arith.constant 1.000000e+00 : f32
    %2 = vector.broadcast %cst : f32 to vector<4x128xf32>
    %3 = arith.mulf %2, %1 : vector<4x128xf32>
    %4 = math.sin %3 : vector<4x128xf32>
    %5 = math.cos %3 : vector<4x128xf32>
    %cst_1 = arith.constant 2.000000e+00 : f32
    %6 = vector.broadcast %cst_1 : f32 to vector<4x128xf32>
    %7 = arith.mulf %6, %4 : vector<4x128xf32>
    %8 = arith.mulf %7, %5 : vector<4x128xf32>
    %cst_2 = arith.constant 2.000000e+00 : f32
    %9 = vector.broadcast %cst_2 : f32 to vector<4x128xf32>
    %10 = arith.mulf %9, %4 : vector<4x128xf32>
    %11 = arith.mulf %10, %4 : vector<4x128xf32>
    %cst_3 = arith.constant 1.000000e+00 : f32
    %12 = vector.broadcast %cst_3 : f32 to vector<4x128xf32>
    %13 = arith.subf %12, %11 : vector<4x128xf32>
    %cst_4 = arith.constant 4.000000e+00 : f32
    %14 = vector.broadcast %cst_4 : f32 to vector<4x128xf32>
    %15 = arith.mulf %14, %1 : vector<4x128xf32>
    %16 = math.sin %15 : vector<4x128xf32>
    %17 = math.cos %15 : vector<4x128xf32>
    %cst_5 = arith.constant 2.000000e+00 : f32
    %18 = vector.broadcast %cst_5 : f32 to vector<4x128xf32>
    %19 = arith.mulf %18, %16 : vector<4x128xf32>
    %20 = arith.mulf %19, %17 : vector<4x128xf32>
    %cst_6 = arith.constant 2.000000e+00 : f32
    %21 = vector.broadcast %cst_6 : f32 to vector<4x128xf32>
    %22 = arith.mulf %21, %16 : vector<4x128xf32>
    %23 = arith.mulf %22, %16 : vector<4x128xf32>
    %cst_7 = arith.constant 1.000000e+00 : f32
    %24 = vector.broadcast %cst_7 : f32 to vector<4x128xf32>
    %25 = arith.subf %24, %23 : vector<4x128xf32>
    %cst_8 = arith.constant 0.000000e+00 : f32
    %26 = vector.broadcast %cst_8 : f32 to vector<4x128xf32>
    %27 = tpu.concatenate %1, %4, %5, %8, %13, %16, %17, %20, %25, %26 in 0 : vector<4x128xf32>, vector<4x128xf32>, vector<4x128xf32>, vector<4x128xf32>, vector<4x128xf32>, vector<4x128xf32>, vector<4x128xf32>, vector<4x128xf32>, vector<4x128xf32>, vector<4x128xf32> -> vector<40x128xf32>
    %28 = tpu.transpose %27, [1, 0] : vector<40x128xf32> -> vector<128x40xf32>
    %29 = vector.extract_strided_slice %28 {offsets = [0, 0], sizes = [128, 36], strides = [1, 1]} : vector<128x40xf32> to vector<128x36xf32>
    %c0_9 = arith.constant 0 : index
    %c0_10 = arith.constant 0 : index
    %30 = vector.load %arg2[%c0_9, %c0_10] : memref<128x36xf32, #tpu.memory_space<vmem>>, vector<128x36xf32>
    tpu.vector_store %arg2[%c0_9, %c0_10], %29 {strides = array<i32>} : memref<128x36xf32, #tpu.memory_space<vmem>>, vector<128x36xf32>,
    return
  }
  func.func @transform_0(%arg0: i32) -> (i32, i32) {
    %c0_i32 = arith.constant 0 : i32
    %c0_i32_0 = arith.constant 0 : i32
    return %arg0, %c0_i32 : i32, i32
  }
  func.func @transform_1(%arg0: i32) -> (i32, i32) {
    %c0_i32 = arith.constant 0 : i32
    %c0_i32_0 = arith.constant 0 : i32
    return %arg0, %c0_i32 : i32, i32
  }
}

</mosaic_0001>

<llo_original>
// kernel: tpu_custom_call.1
$region0: #{tpu_custom_call.1}
  #allocation0 [shape = 'u32[]', space=smem, size = 0x4, offset = 0x4, fixed_abs, tag = 'smem constant byte address 0x4 - core index']
  #allocation1 [shape = 'u32[72,128]{1,0:T(1,128)}', space=vmem, size = 0x9000, scoped, tag = 'internal scratch']
  %s0 = inlined_call_operand.vmem [shape: f32[600,4], index: 0, kind: input, shape index: {}]
  %s1 = inlined_call_operand.vmem [shape: f32[600,36], index: 1, kind: output, shape index: {}]
  %s2 = sld [smem:[#allocation0]]
  $region85: #{tpu_custom_call.1} parent=0
    _
  %s4 = ssub.s32 1, %s2
  %s5 = scalar_select 0, %s4, %s2
  $region1: #{tpu_custom_call.1} parent=0
    #allocation2 [shape = 'u8[131072]{0}', space=vmem, size = 0x20000, scoped, tag = 'output window, operand 0']
    loop: start=0, step=1, limit=7
    $region2: #{tpu_custom_call.1} parent=1 // loop_pre_header
      _
    $region3: #{tpu_custom_call.1} parent=1 // loop_header
      %s7 = sphi 0, %s11
      %p8 = scmp.ge.s32.totalorder %s7, 7
      %s17 = sphi 0, %s19
      %s20 = sphi 0, %s17
      %s21 = sphi 0, %s20
      %s37 = sphi 0, %s21
      %s43 = sphi 0, %s45
      %s46 = sphi 0, %s43
      %s47 = sphi 0, %s46
      %s63 = sphi 0, %s47
    $region4: #{tpu_custom_call.1} parent=1 // loop_header_branch
      %10 = sbr.rel (%p8) target = $region8
    $region5: #{tpu_custom_call.1} parent=1 // loop_body
      %s12 = ssub.s32 %s7, 1
      %s13 = ssub.s32 %s7, 2
      %s14 = sadd.s32 %s7, 1
      %s15 = ssub.s32 %s7, %s14
      %p16 = scmp.eq.s32.totalorder %s15, 0
      %s18 = sadd.s32 %s17, 1
      %s19 = scalar_select %p16, %s17, %s18
      %p22 = pneg %p16
      %p23 = scmp.eq.s32.totalorder %s7, 4
      %p24 = por %p22, %p23
      %p25 = scmp.ne.s32.totalorder %s17, %s20
      %p26 = scmp.eq.s32.totalorder %s7, 0
      %p27 = por %p25, %p26
      %p28 = scmp.ne.s32.totalorder %s17, %s20
      %p29 = scmp.eq.s32.totalorder %s12, 4
      %p30 = por %p28, %p29
      %p31 = scmp.ne.s32.totalorder %s20, %s21
      %p32 = scmp.eq.s32.totalorder %s12, 0
      %p33 = por %p31, %p32
      %p34 = scmp.ne.s32.totalorder %s20, %s21
      %p35 = scmp.eq.s32.totalorder %s13, 4
      %p36 = por %p34, %p35
      %p38 = scmp.ne.s32.totalorder %s21, %s37
      %p39 = scmp.eq.s32.totalorder %s13, 0
      %p40 = por %p38, %p39
      %s41 = ssub.s32 %s7, %s14
      %p42 = scmp.eq.s32.totalorder %s41, 0
      %s44 = sadd.s32 %s43, 1
      %s45 = scalar_select %p42, %s43, %s44
      %p48 = pneg %p42
      %p49 = scmp.eq.s32.totalorder %s7, 4
      %p50 = por %p48, %p49
      %p51 = scmp.ne.s32.totalorder %s43, %s46
      %p52 = scmp.eq.s32.totalorder %s7, 0
      %p53 = por %p51, %p52
      %p54 = scmp.ne.s32.totalorder %s43, %s46
      %p55 = scmp.eq.s32.totalorder %s12, 4
      %p56 = por %p54, %p55
      %p57 = scmp.ne.s32.totalorder %s46, %s47
      %p58 = scmp.eq.s32.totalorder %s12, 0
      %p59 = por %p57, %p58
      %p60 = scmp.ne.s32.totalorder %s46, %s47
      %p61 = scmp.eq.s32.totalorder %s13, 4
      %p62 = por %p60, %p61
      %p64 = scmp.ne.s32.totalorder %s47, %s63
      %p65 = scmp.eq.s32.totalorder %s13, 0
      %p66 = por %p64, %p65
      %p67 = scmp.le.s32.totalorder 1, %s7
      %p68 = scmp.lt.s32.totalorder %s7, 6
      %p69 = pnand %p67, %p68
      %p70 = pneg %p69
      // Predicated region
      $region9: #{tpu_custom_call.1} parent=5 // pred_check
        _
      $region10: #{tpu_custom_call.1} parent=5 // pred_check_branch
        %72 = sbr.rel (%p69) target = $region12
      $region11: #{tpu_custom_call.1} parent=5 // pred_region
        %s73 = ssub.s32 %s7, 1
      $region12: #{tpu_custom_call.1} parent=5 // pred_fallthru
        _
      %p74 = scmp.lt.s32.totalorder %s7, 5
      // Predicated region
      $region13: #{tpu_custom_call.1} parent=5 // pred_check
        %p75 = pneg %p74
      $region14: #{tpu_custom_call.1} parent=5 // pred_check_branch
        %77 = sbr.rel (%p75) target = $region16
      $region15: #{tpu_custom_call.1} parent=5 // pred_region
        // Predicated region
        $region17: #{tpu_custom_call.1} parent=15 // pred_check
          %p78 = pneg %p27
        $region18: #{tpu_custom_call.1} parent=15 // pred_check_branch
          %80 = sbr.rel (%p78) target = $region20
        $region19: #{tpu_custom_call.1} parent=15 // pred_region
          %s81 = smul.u32 16, %s7
          %s82 = ssub.s32 75, %s81
          %p83 = scmp.lt.s32.totalorder %s82, 16
          %s84 = scalar_select %p83, %s82, 16
          %s85 = smul.u32 8, %s84
          %p86 = scmp.lt.s32.totalorder %s81, 74
          %s87 = scalar_select %p86, %s81, 74
          %s88 = smul.addr %s87, 8
          %s89 = scalar_lea.vmem %s0, %s88
          %s90 = smul.u32 16, %s7
          %s91 = ssub.s32 75, %s90
          %p92 = scmp.lt.s32.totalorder %s91, 16
          %s93 = scalar_select %p92, %s91, 16
          %s94 = smul.u32 8, %s93
        $region20: #{tpu_custom_call.1} parent=15 // pred_fallthru
          _
      $region16: #{tpu_custom_call.1} parent=5 // pred_fallthru
        _
      %p95 = scmp.le.s32.totalorder 1, %s7
      %p96 = scmp.lt.s32.totalorder %s7, 6
      %p97 = pnand %p95, %p96
      %p98 = pneg %p97
      // Predicated region
      $region21: #{tpu_custom_call.1} parent=5 // pred_check
        _
      $region22: #{tpu_custom_call.1} parent=5 // pred_check_branch
        %100 = sbr.rel (%p97) target = $region24
      $region23: #{tpu_custom_call.1} parent=5 // pred_region
        %s101 = ssub.s32 %s7, 1
        %s102 = smul.u32 16, %s12
        %s103 = ssub.s32 75, %s102
        %p104 = scmp.lt.s32.totalorder %s103, 16
        %s105 = scalar_select %p104, %s103, 16
        %s106 = smul.u32 8, %s105
        %p107 = scmp.lt.s32.totalorder %s102, 74
        %s108 = scalar_select %p107, %s102, 74
        %s109 = smul.addr %s108, 8
        %s110 = scalar_lea.vmem %s0, %s109
        %p111 = pneg %p33
        %p112 = pneg %p30
        %p113 = pneg %p59
        %p114 = pneg %p56
        %s115 = sand.u32 %s46, 1
        %s116 = sand.u32 %s46, 1
        %s117 = smul.addr %s116, 128
        %s118 = scalar_lea.vmem [#allocation2], %s117
        %s119 = smul.u32 16, %s12
        %s120 = ssub.s32 75, %s119
        %p121 = scmp.lt.s32.totalorder %s120, 16
        %s122 = scalar_select %p121, %s120, 16
        %s123 = smul.u32 8, %s122
        %p124 = scmp.lt.s32.totalorder %s119, 74
        %s125 = scalar_select %p124, %s119, 74
        %s126 = smul.addr %s125, 8
        %s127 = scalar_lea.vmem %s0, %s126
        %s128 = smul.u32 16, %s12
        %s129 = ssub.s32 75, %s128
        %p130 = scmp.lt.s32.totalorder %s129, 16
        %s131 = scalar_select %p130, %s129, 16
        %s132 = smul.u32 8, %s131
        %s133 = smul.u32 16, %s12
        %s134 = ssub.s32 75, %s133
        %p135 = scmp.lt.s32.totalorder %s134, 16
        %s136 = scalar_select %p135, %s134, 16
        %s137 = smul.u32 8, %s136
        %v138 = vld [vmem:[%s127] sm:$0xff]
        %v139 = vld [vmem:[%s127 + $0x8] sm:$0xff]
        %v140 = vld [vmem:[%s127 + $0x10] sm:$0xff]
        %v141 = vld [vmem:[%s127 + $0x18] sm:$0xff]
        %v142 = vld [vmem:[%s127 + $0x20] sm:$0xff]
        %v143 = vld [vmem:[%s127 + $0x28] sm:$0xff]
        %v144 = vld [vmem:[%s127 + $0x30] sm:$0xff]
        %v145 = vld [vmem:[%s127 + $0x38] sm:$0xff]
        %v146 = vld [vmem:[%s127 + $0x40] sm:$0xff]
        %v147 = vld [vmem:[%s127 + $0x48] sm:$0xff]
        %v148 = vld [vmem:[%s127 + $0x50] sm:$0xff]
        %v149 = vld [vmem:[%s127 + $0x58] sm:$0xff]
        %v150 = vld [vmem:[%s127 + $0x60] sm:$0xff]
        %v151 = vld [vmem:[%s127 + $0x68] sm:$0xff]
        %v152 = vld [vmem:[%s127 + $0x70] sm:$0xff]
        %v153 = vld [vmem:[%s127 + $0x78] sm:$0xff]
        %154 = vxpose.xlu0.b32.start [1/16] %v138, 128
        %155 = vxpose.xlu0.b32.cont [2/16] %v139, 128
        %156 = vxpose.xlu0.b32.cont [3/16] %v140, 128
        %157 = vxpose.xlu0.b32.cont [4/16] %v141, 128
        %158 = vxpose.xlu0.b32.cont [5/16] %v142, 128
        %159 = vxpose.xlu0.b32.cont [6/16] %v143, 128
        %160 = vxpose.xlu0.b32.cont [7/16] %v144, 128
        %161 = vxpose.xlu0.b32.cont [8/16] %v145, 128
        %162 = vxpose.xlu0.b32.cont [9/16] %v146, 128
        %163 = vxpose.xlu0.b32.cont [10/16] %v147, 128
        %164 = vxpose.xlu0.b32.cont [11/16] %v148, 128
        %165 = vxpose.xlu0.b32.cont [12/16] %v149, 128
        %166 = vxpose.xlu0.b32.cont [13/16] %v150, 128
        %167 = vxpose.xlu0.b32.cont [14/16] %v151, 128
        %168 = vxpose.xlu0.b32.cont [15/16] %v152, 128
        %169 = vxpose.xlu0.b32.end [16/16] %v153, 128
        %v170 = vpop.trf.xlu0
        %v171 = vpop.trf.xlu0
        %v172 = vpop.trf.xlu0
        %v173 = vpop.trf.xlu0
        %v174 = vpop.trf.xlu0
        %v175 = vpop.trf.xlu0
        %v176 = vpop.trf.xlu0
        %v177 = vpop.trf.xlu0
        %v178 = vpop.trf.xlu0
        %v179 = vpop.trf.xlu0
        %v180 = vpop.trf.xlu0
        %v181 = vpop.trf.xlu0
        %v182 = vpop.trf.xlu0
        %v183 = vpop.trf.xlu0
        %v184 = vpop.trf.xlu0
        %v185 = vpop.trf.xlu0
        %v186 = vand.u32 2147483647, %v170
        %vm187 = vcmp.le.f32.partialorder %v186, 0.7853982
        %vm188 = vcmp.lt.s32.totalorder %v170, 0
        %v189 = vand.u32 %v170, 2139095040
        %v190 = vshrl.u32 %v189, 23
        %v191 = vsub.s32 %v190, 127
        %v192 = vand.u32 2147483647, %v170
        %v193 = vand.u32 %v192, 8388607
        %v194 = vor.u32 %v193, 8388608
        %v195 = vsub.s32 0, %v194
        %v196 = vadd.s32 %v191, 1
        %vm197 = vcmp.gt.s32.totalorder %v196, 0
        %v198 = vsel %vm197, %v196, 0
        %v199 = vshrl.u32 %v198, 5
        %v200 = vand.u32 %v198, 31
        %v201 = vsub.s32 32, %v200
        %v202 = vshrl.u32 683565275, %v201
        %v203 = vshll.u32 683565275, %v200
        %v204 = vshrl.u32 2475754826, %v201
        %v205 = vor.u32 %v203, %v204
        %v206 = vshll.u32 2475754826, %v200
        %v207 = vshrl.u32 2131351028, %v201
        %v208 = vor.u32 %v206, %v207
        %v209 = vshll.u32 2131351028, %v200
        %v210 = vshrl.u32 2102212464, %v201
        %v211 = vor.u32 %v209, %v210
        %v212 = vshll.u32 2102212464, %v200
        %v213 = vshrl.u32 920167782, %v201
        %v214 = vor.u32 %v212, %v213
        %v215 = vshll.u32 920167782, %v200
        %v216 = vshrl.u32 1326507024, %v201
        %v217 = vor.u32 %v215, %v216
        %vm218 = vcmp.lt.s32.totalorder %v199, 1
        %vm219 = vcmp.lt.s32.totalorder %v199, 2
        %vm220 = vcmp.lt.s32.totalorder %v199, 3
        %vm221 = vcmp.lt.s32.totalorder %v199, 4
        %v222 = vsel %vm218, %v202, %v205
        %v223 = vsel %vm221, %v211, 2102212464
        %v224 = vsel %vm220, %v208, %v223
        %v225 = vsel %vm219, %v222, %v224
        %v226 = vsel %vm218, %v205, %v208
        %v227 = vsel %vm221, %v214, 920167782
        %v228 = vsel %vm220, %v211, %v227
        %v229 = vsel %vm219, %v226, %v228
        %v230 = vsel %vm218, %v208, %v211
        %v231 = vsel %vm221, %v217, 1326507024
        %v232 = vsel %vm220, %v214, %v231
        %v233 = vsel %vm219, %v230, %v232
        %v234 = vshll.u32 %v194, 8
        %v235 = vand.u32 %v234, 65535
        %v236 = vshrl.u32 %v234, 16
        %v237 = vand.u32 %v233, 65535
        %v238 = vshrl.u32 %v233, 16
        %v239 = vmul.u32 %v235, %v237
        %v240 = vmul.u32 %v235, %v238
        %v241 = vmul.u32 %v236, %v237
        %v242 = vmul.u32 %v236, %v238
        %v243 = vshll.u32 %v240, 16
        %v244 = vshrl.u32 %v240, 16
        %v245 = vshll.u32 %v241, 16
        %v246 = vshrl.u32 %v241, 16
        %vm247 = vc.u32 %v239, %v243
        %v248 = vsel %vm247, 1, 0
        %v249 = vadd.s32 %v239, %v243
        %v250 = vadd.s32 %v242, %v248
        %vm251 = vc.u32 %v249, %v245
        %v252 = vsel %vm251, 1, 0
        %v253 = vadd.s32 %v249, %v245
        %v254 = vadd.s32 %v250, %v252
        %v255 = vadd.s32 %v254, %v244
        %v256 = vadd.s32 %v255, %v246
        %v257 = vand.u32 %v234, 65535
        %v258 = vshrl.u32 %v234, 16
        %v259 = vand.u32 %v229, 65535
        %v260 = vshrl.u32 %v229, 16
        %v261 = vmul.u32 %v257, %v259
        %v262 = vmul.u32 %v257, %v260
        %v263 = vmul.u32 %v258, %v259
        %v264 = vmul.u32 %v258, %v260
        %v265 = vshll.u32 %v262, 16
        %v266 = vshrl.u32 %v262, 16
        %v267 = vshll.u32 %v263, 16
        %v268 = vshrl.u32 %v263, 16
        %vm269 = vc.u32 %v261, %v265
        %v270 = vsel %vm269, 1, 0
        %v271 = vadd.s32 %v261, %v265
        %v272 = vadd.s32 %v264, %v270
        %vm273 = vc.u32 %v271, %v267
        %v274 = vsel %vm273, 1, 0
        %v275 = vadd.s32 %v271, %v267
        %v276 = vadd.s32 %v272, %v274
        %v277 = vadd.s32 %v276, %v266
        %v278 = vadd.s32 %v277, %v268
        %v279 = vmul.u32 %v234, %v225
        %v280 = vadd.s32 %v256, %v275
        %vm281 = vc.u32 %v256, %v275
        %v282 = vadd.s32 %v278, 1
        %v283 = vsel %vm281, %v282, %v278
        %v284 = vadd.s32 %v279, %v283
        %v285 = vadd.s32 %v284, 536870912
        %v286 = vshrl.u32 %v285, 30
        %v287 = vshll.u32 %v286, 30
        %v288 = vsub.s32 %v284, %v287
        %vm289 = vcmp.lt.s32.totalorder %v288, 0
        %v290 = vsub.s32 0, %v288
        %v291 = vsel %vm289, %v290, %v288
        %v292 = vclz %v291
        %v293 = vsub.s32 %v292, 2
        %vm294 = vcmp.gt.s32.totalorder 0, %v293
        %v295 = vsel %vm294, 0, %v293
        %v296 = vsub.s32 32, %v295
        %v297 = vshll.u32 %v288, %v295
        %v298 = vshrl.u32 %v280, %v296
        %v299 = vor.u32 %v297, %v298
        %v300 = vsub.s32 4294967266, %v295
        %v301 = vadd.s32 %v300, 127
        %v302 = vshll.u32 %v301, 23
        %v303 = vor.u32 4788187, %v302
        %v304 = vand.u32 2147483647, %v303
        %v306 = vcvt.s32.f32 %v299
        %v307 = vmul.f32 %v306, %v304
        %v308 = vxor.u32 %v307, 2147483648
        %v309 = vsel %vm188, %v308, %v307
        %v310 = vsub.s32 4, %v286
        %v311 = vsel %vm188, %v310, %v286
        %v312 = vsel %vm187, %v170, %v309
        %v313 = vsel %vm187, 0, %v311
        %v314 = vmul.f32 %v312, %v312
        %v315 = vmul.f32 %v314, -0.001358992
        %v316 = vadd.f32 %v315, 0.041655596
        %v317 = vmul.f32 %v314, %v316
        %v318 = vadd.f32 %v317, -0.4999988
        %v319 = vmul.f32 %v314, %v318
        %v320 = vadd.f32 1.0, %v319
        %v321 = vmul.f32 %v312, %v312
        %v322 = vmul.f32 %v321, -0.00019511016
        %v323 = vadd.f32 %v322, 0.008332121
        %v324 = vmul.f32 %v321, %v323
        %v325 = vadd.f32 %v324, -0.16666654
        %v326 = vmul.f32 %v321, %v325
        %v327 = vadd.f32 %v326, 1.0
        %v328 = vmul.f32 %v327, %v312
        %vm329 = vweird.f32 %v170
        %v330 = vadd.s32 %v313, 3
        %v331 = vand.u32 %v330, 3
        %vm332 = vcmp.lt.s32.totalorder %v331, 2
        %vm333 = vcmp.eq.s32.totalorder %v331, 0
        %v334 = vxor.u32 %v328, 2147483648
        %v335 = vsel %vm333, %v320, %v334
        %vm336 = vcmp.eq.s32.totalorder %v331, 2
        %v337 = vxor.u32 %v320, 2147483648
        %v338 = vsel %vm336, %v337, %v328
        %v339 = vsel %vm332, %v335, %v338
        %v340 = vsel %vm329, nan, %v339
        %v341 = vand.u32 2147483647, %v170
        %vm342 = vcmp.le.f32.partialorder %v341, 0.7853982
        %vm343 = vcmp.lt.s32.totalorder %v170, 0
        %v344 = vand.u32 %v170, 2139095040
        %v345 = vshrl.u32 %v344, 23
        %v346 = vsub.s32 %v345, 127
        %v347 = vand.u32 2147483647, %v170
        %v348 = vand.u32 %v347, 8388607
        %v349 = vor.u32 %v348, 8388608
        %v350 = vsub.s32 0, %v349
        %v351 = vadd.s32 %v346, 1
        %vm352 = vcmp.gt.s32.totalorder %v351, 0
        %v353 = vsel %vm352, %v351, 0
        %v354 = vshrl.u32 %v353, 5
        %v355 = vand.u32 %v353, 31
        %v356 = vsub.s32 32, %v355
        %v357 = vshrl.u32 683565275, %v356
        %v358 = vshll.u32 683565275, %v355
        %v359 = vshrl.u32 2475754826, %v356
        %v360 = vor.u32 %v358, %v359
        %v361 = vshll.u32 2475754826, %v355
        %v362 = vshrl.u32 2131351028, %v356
        %v363 = vor.u32 %v361, %v362
        %v364 = vshll.u32 2131351028, %v355
        %v365 = vshrl.u32 2102212464, %v356
        %v366 = vor.u32 %v364, %v365
        %v367 = vshll.u32 2102212464, %v355
        %v368 = vshrl.u32 920167782, %v356
        %v369 = vor.u32 %v367, %v368
        %v370 = vshll.u32 920167782, %v355
        %v371 = vshrl.u32 1326507024, %v356
        %v372 = vor.u32 %v370, %v371
        %vm373 = vcmp.lt.s32.totalorder %v354, 1
        %vm374 = vcmp.lt.s32.totalorder %v354, 2
        %vm375 = vcmp.lt.s32.totalorder %v354, 3
        %vm376 = vcmp.lt.s32.totalorder %v354, 4
        %v377 = vsel %vm373, %v357, %v360
        %v378 = vsel %vm376, %v366, 2102212464
        %v379 = vsel %vm375, %v363, %v378
        %v380 = vsel %vm374, %v377, %v379
        %v381 = vsel %vm373, %v360, %v363
        %v382 = vsel %vm376, %v369, 920167782
        %v383 = vsel %vm375, %v366, %v382
        %v384 = vsel %vm374, %v381, %v383
        %v385 = vsel %vm373, %v363, %v366
        %v386 = vsel %vm376, %v372, 1326507024
        %v387 = vsel %vm375, %v369, %v386
        %v388 = vsel %vm374, %v385, %v387
        %v389 = vshll.u32 %v349, 8
        %v390 = vand.u32 %v389, 65535
        %v391 = vshrl.u32 %v389, 16
        %v392 = vand.u32 %v388, 65535
        %v393 = vshrl.u32 %v388, 16
        %v394 = vmul.u32 %v390, %v392
        %v395 = vmul.u32 %v390, %v393
        %v396 = vmul.u32 %v391, %v392
        %v397 = vmul.u32 %v391, %v393
        %v398 = vshll.u32 %v395, 16
        %v399 = vshrl.u32 %v395, 16
        %v400 = vshll.u32 %v396, 16
        %v401 = vshrl.u32 %v396, 16
        %vm402 = vc.u32 %v394, %v398
        %v403 = vsel %vm402, 1, 0
        %v404 = vadd.s32 %v394, %v398
        %v405 = vadd.s32 %v397, %v403
        %vm406 = vc.u32 %v404, %v400
        %v407 = vsel %vm406, 1, 0
        %v408 = vadd.s32 %v404, %v400
        %v409 = vadd.s32 %v405, %v407
        %v410 = vadd.s32 %v409, %v399
        %v411 = vadd.s32 %v410, %v401
        %v412 = vand.u32 %v389, 65535
        %v413 = vshrl.u32 %v389, 16
        %v414 = vand.u32 %v384, 65535
        %v415 = vshrl.u32 %v384, 16
        %v416 = vmul.u32 %v412, %v414
        %v417 = vmul.u32 %v412, %v415
        %v418 = vmul.u32 %v413, %v414
        %v419 = vmul.u32 %v413, %v415
        %v420 = vshll.u32 %v417, 16
        %v421 = vshrl.u32 %v417, 16
        %v422 = vshll.u32 %v418, 16
        %v423 = vshrl.u32 %v418, 16
        %vm424 = vc.u32 %v416, %v420
        %v425 = vsel %vm424, 1, 0
        %v426 = vadd.s32 %v416, %v420
        %v427 = vadd.s32 %v419, %v425
        %vm428 = vc.u32 %v426, %v422
        %v429 = vsel %vm428, 1, 0
        %v430 = vadd.s32 %v426, %v422
        %v431 = vadd.s32 %v427, %v429
        %v432 = vadd.s32 %v431, %v421
        %v433 = vadd.s32 %v432, %v423
        %v434 = vmul.u32 %v389, %v380
        %v435 = vadd.s32 %v411, %v430
        %vm436 = vc.u32 %v411, %v430
        %v437 = vadd.s32 %v433, 1
        %v438 = vsel %vm436, %v437, %v433
        %v439 = vadd.s32 %v434, %v438
        %v440 = vadd.s32 %v439, 536870912
        %v441 = vshrl.u32 %v440, 30
        %v442 = vshll.u32 %v441, 30
        %v443 = vsub.s32 %v439, %v442
        %vm444 = vcmp.lt.s32.totalorder %v443, 0
        %v445 = vsub.s32 0, %v443
        %v446 = vsel %vm444, %v445, %v443
        %v447 = vclz %v446
        %v448 = vsub.s32 %v447, 2
        %vm449 = vcmp.gt.s32.totalorder 0, %v448
        %v450 = vsel %vm449, 0, %v448
        %v451 = vsub.s32 32, %v450
        %v452 = vshll.u32 %v443, %v450
        %v453 = vshrl.u32 %v435, %v451
        %v454 = vor.u32 %v452, %v453
        %v455 = vsub.s32 4294967266, %v450
        %v456 = vadd.s32 %v455, 127
        %v457 = vshll.u32 %v456, 23
        %v458 = vor.u32 4788187, %v457
        %v459 = vand.u32 2147483647, %v458
        %v461 = vcvt.s32.f32 %v454
        %v462 = vmul.f32 %v461, %v459
        %v463 = vxor.u32 %v462, 2147483648
        %v464 = vsel %vm343, %v463, %v462
        %v465 = vsub.s32 4, %v441
        %v466 = vsel %vm343, %v465, %v441
        %v467 = vsel %vm342, %v170, %v464
        %v468 = vsel %vm342, 0, %v466
        %v469 = vmul.f32 %v467, %v467
        %v470 = vmul.f32 %v469, -0.001358992
        %v471 = vadd.f32 %v470, 0.041655596
        %v472 = vmul.f32 %v469, %v471
        %v473 = vadd.f32 %v472, -0.4999988
        %v474 = vmul.f32 %v469, %v473
        %v475 = vadd.f32 1.0, %v474
        %v476 = vmul.f32 %v467, %v467
        %v477 = vmul.f32 %v476, -0.00019511016
        %v478 = vadd.f32 %v477, 0.008332121
        %v479 = vmul.f32 %v476, %v478
        %v480 = vadd.f32 %v479, -0.16666654
        %v481 = vmul.f32 %v476, %v480
        %v482 = vadd.f32 %v481, 1.0
        %v483 = vmul.f32 %v482, %v467
        %vm484 = vweird.f32 %v170
        %v485 = vand.u32 %v468, 3
        %vm486 = vcmp.lt.s32.totalorder %v485, 2
        %vm487 = vcmp.eq.s32.totalorder %v485, 0
        %v488 = vxor.u32 %v483, 2147483648
        %v489 = vsel %vm487, %v475, %v488
        %vm490 = vcmp.eq.s32.totalorder %v485, 2
        %v491 = vxor.u32 %v475, 2147483648
        %v492 = vsel %vm490, %v491, %v483
        %v493 = vsel %vm486, %v489, %v492
        %v494 = vsel %vm484, nan, %v493
        %v495 = vmul.f32 %v340, 2.0
        %v496 = vmul.f32 %v495, %v494
        %v497 = vmul.f32 %v495, %v340
        %v498 = vsub.f32 1.0, %v497
        %v499 = vmul.f32 %v170, 4.0
        %v500 = vand.u32 2147483647, %v499
        %vm501 = vcmp.le.f32.partialorder %v500, 0.7853982
        %vm502 = vcmp.lt.s32.totalorder %v499, 0
        %v503 = vand.u32 %v499, 2139095040
        %v504 = vshrl.u32 %v503, 23
        %v505 = vsub.s32 %v504, 127
        %v506 = vand.u32 2147483647, %v499
        %v507 = vand.u32 %v506, 8388607
        %v508 = vor.u32 %v507, 8388608
        %v509 = vsub.s32 0, %v508
        %v510 = vadd.s32 %v505, 1
        %vm511 = vcmp.gt.s32.totalorder %v510, 0
        %v512 = vsel %vm511, %v510, 0
        %v513 = vshrl.u32 %v512, 5
        %v514 = vand.u32 %v512, 31
        %v515 = vsub.s32 32, %v514
        %v516 = vshrl.u32 683565275, %v515
        %v517 = vshll.u32 683565275, %v514
        %v518 = vshrl.u32 2475754826, %v515
        %v519 = vor.u32 %v517, %v518
        %v520 = vshll.u32 2475754826, %v514
        %v521 = vshrl.u32 2131351028, %v515
        %v522 = vor.u32 %v520, %v521
        %v523 = vshll.u32 2131351028, %v514
        %v524 = vshrl.u32 2102212464, %v515
        %v525 = vor.u32 %v523, %v524
        %v526 = vshll.u32 2102212464, %v514
        %v527 = vshrl.u32 920167782, %v515
        %v528 = vor.u32 %v526, %v527
        %v529 = vshll.u32 920167782, %v514
        %v530 = vshrl.u32 1326507024, %v515
        %v531 = vor.u32 %v529, %v530
        %vm532 = vcmp.lt.s32.totalorder %v513, 1
        %vm533 = vcmp.lt.s32.totalorder %v513, 2
        %vm534 = vcmp.lt.s32.totalorder %v513, 3
        %vm535 = vcmp.lt.s32.totalorder %v513, 4
        %v536 = vsel %vm532, %v516, %v519
        %v537 = vsel %vm535, %v525, 2102212464
        %v538 = vsel %vm534, %v522, %v537
        %v539 = vsel %vm533, %v536, %v538
        %v540 = vsel %vm532, %v519, %v522
        %v541 = vsel %vm535, %v528, 920167782
        %v542 = vsel %vm534, %v525, %v541
        %v543 = vsel %vm533, %v540, %v542
        %v544 = vsel %vm532, %v522, %v525
        %v545 = vsel %vm535, %v531, 1326507024
        %v546 = vsel %vm534, %v528, %v545
        %v547 = vsel %vm533, %v544, %v546
        %v548 = vshll.u32 %v508, 8
        %v549 = vand.u32 %v548, 65535
        %v550 = vshrl.u32 %v548, 16
        %v551 = vand.u32 %v547, 65535
        %v552 = vshrl.u32 %v547, 16
        %v553 = vmul.u32 %v549, %v551
        %v554 = vmul.u32 %v549, %v552
        %v555 = vmul.u32 %v550, %v551
        %v556 = vmul.u32 %v550, %v552
        %v557 = vshll.u32 %v554, 16
        %v558 = vshrl.u32 %v554, 16
        %v559 = vshll.u32 %v555, 16
        %v560 = vshrl.u32 %v555, 16
        %vm561 = vc.u32 %v553, %v557
        %v562 = vsel %vm561, 1, 0
        %v563 = vadd.s32 %v553, %v557
        %v564 = vadd.s32 %v556, %v562
        %vm565 = vc.u32 %v563, %v559
        %v566 = vsel %vm565, 1, 0
        %v567 = vadd.s32 %v563, %v559
        %v568 = vadd.s32 %v564, %v566
        %v569 = vadd.s32 %v568, %v558
        %v570 = vadd.s32 %v569, %v560
        %v571 = vand.u32 %v548, 65535
        %v572 = vshrl.u32 %v548, 16
        %v573 = vand.u32 %v543, 65535
        %v574 = vshrl.u32 %v543, 16
        %v575 = vmul.u32 %v571, %v573
        %v576 = vmul.u32 %v571, %v574
        %v577 = vmul.u32 %v572, %v573
        %v578 = vmul.u32 %v572, %v574
        %v579 = vshll.u32 %v576, 16
        %v580 = vshrl.u32 %v576, 16
        %v581 = vshll.u32 %v577, 16
        %v582 = vshrl.u32 %v577, 16
        %vm583 = vc.u32 %v575, %v579
        %v584 = vsel %vm583, 1, 0
        %v585 = vadd.s32 %v575, %v579
        %v586 = vadd.s32 %v578, %v584
        %vm587 = vc.u32 %v585, %v581
        %v588 = vsel %vm587, 1, 0
        %v589 = vadd.s32 %v585, %v581
        %v590 = vadd.s32 %v586, %v588
        %v591 = vadd.s32 %v590, %v580
        %v592 = vadd.s32 %v591, %v582
        %v593 = vmul.u32 %v548, %v539
        %v594 = vadd.s32 %v570, %v589
        %vm595 = vc.u32 %v570, %v589
        %v596 = vadd.s32 %v592, 1
        %v597 = vsel %vm595, %v596, %v592
        %v598 = vadd.s32 %v593, %v597
        %v599 = vadd.s32 %v598, 536870912
        %v600 = vshrl.u32 %v599, 30
        %v601 = vshll.u32 %v600, 30
        %v602 = vsub.s32 %v598, %v601
        %vm603 = vcmp.lt.s32.totalorder %v602, 0
        %v604 = vsub.s32 0, %v602
        %v605 = vsel %vm603, %v604, %v602
        %v606 = vclz %v605
        %v607 = vsub.s32 %v606, 2
        %vm608 = vcmp.gt.s32.totalorder 0, %v607
        %v609 = vsel %vm608, 0, %v607
        %v610 = vsub.s32 32, %v609
        %v611 = vshll.u32 %v602, %v609
        %v612 = vshrl.u32 %v594, %v610
        %v613 = vor.u32 %v611, %v612
        %v614 = vsub.s32 4294967266, %v609
        %v615 = vadd.s32 %v614, 127
        %v616 = vshll.u32 %v615, 23
        %v617 = vor.u32 4788187, %v616
        %v618 = vand.u32 2147483647, %v617
        %v620 = vcvt.s32.f32 %v613
        %v621 = vmul.f32 %v620, %v618
        %v622 = vxor.u32 %v621, 2147483648
        %v623 = vsel %vm502, %v622, %v621
        %v624 = vsub.s32 4, %v600
        %v625 = vsel %vm502, %v624, %v600
        %v626 = vsel %vm501, %v499, %v623
        %v627 = vsel %vm501, 0, %v625
        %v628 = vmul.f32 %v626, %v626
        %v629 = vmul.f32 %v628, -0.001358992
        %v630 = vadd.f32 %v629, 0.041655596
        %v631 = vmul.f32 %v628, %v630
        %v632 = vadd.f32 %v631, -0.4999988
        %v633 = vmul.f32 %v628, %v632
        %v634 = vadd.f32 1.0, %v633
        %v635 = vmul.f32 %v626, %v626
        %v636 = vmul.f32 %v635, -0.00019511016
        %v637 = vadd.f32 %v636, 0.008332121
        %v638 = vmul.f32 %v635, %v637
        %v639 = vadd.f32 %v638, -0.16666654
        %v640 = vmul.f32 %v635, %v639
        %v641 = vadd.f32 %v640, 1.0
        %v642 = vmul.f32 %v641, %v626
        %vm643 = vweird.f32 %v499
        %v644 = vadd.s32 %v627, 3
        %v645 = vand.u32 %v644, 3
        %vm646 = vcmp.lt.s32.totalorder %v645, 2
        %vm647 = vcmp.eq.s32.totalorder %v645, 0
        %v648 = vxor.u32 %v642, 2147483648
        %v649 = vsel %vm647, %v634, %v648
        %vm650 = vcmp.eq.s32.totalorder %v645, 2
        %v651 = vxor.u32 %v634, 2147483648
        %v652 = vsel %vm650, %v651, %v642
        %v653 = vsel %vm646, %v649, %v652
        %v654 = vsel %vm643, nan, %v653
        %v655 = vand.u32 2147483647, %v499
        %vm656 = vcmp.le.f32.partialorder %v655, 0.7853982
        %vm657 = vcmp.lt.s32.totalorder %v499, 0
        %v658 = vand.u32 %v499, 2139095040
        %v659 = vshrl.u32 %v658, 23
        %v660 = vsub.s32 %v659, 127
        %v661 = vand.u32 2147483647, %v499
        %v662 = vand.u32 %v661, 8388607
        %v663 = vor.u32 %v662, 8388608
        %v664 = vsub.s32 0, %v663
        %v665 = vadd.s32 %v660, 1
        %vm666 = vcmp.gt.s32.totalorder %v665, 0
        %v667 = vsel %vm666, %v665, 0
        %v668 = vshrl.u32 %v667, 5
        %v669 = vand.u32 %v667, 31
        %v670 = vsub.s32 32, %v669
        %v671 = vshrl.u32 683565275, %v670
        %v672 = vshll.u32 683565275, %v669
        %v673 = vshrl.u32 2475754826, %v670
        %v674 = vor.u32 %v672, %v673
        %v675 = vshll.u32 2475754826, %v669
        %v676 = vshrl.u32 2131351028, %v670
        %v677 = vor.u32 %v675, %v676
        %v678 = vshll.u32 2131351028, %v669
        %v679 = vshrl.u32 2102212464, %v670
        %v680 = vor.u32 %v678, %v679
        %v681 = vshll.u32 2102212464, %v669
        %v682 = vshrl.u32 920167782, %v670
        %v683 = vor.u32 %v681, %v682
        %v684 = vshll.u32 920167782, %v669
        %v685 = vshrl.u32 1326507024, %v670
        %v686 = vor.u32 %v684, %v685
        %vm687 = vcmp.lt.s32.totalorder %v668, 1
        %vm688 = vcmp.lt.s32.totalorder %v668, 2
        %vm689 = vcmp.lt.s32.totalorder %v668, 3
        %vm690 = vcmp.lt.s32.totalorder %v668, 4
        %v691 = vsel %vm687, %v671, %v674
        %v692 = vsel %vm690, %v680, 2102212464
        %v693 = vsel %vm689, %v677, %v692
        %v694 = vsel %vm688, %v691, %v693
        %v695 = vsel %vm687, %v674, %v677
        %v696 = vsel %vm690, %v683, 920167782
        %v697 = vsel %vm689, %v680, %v696
        %v698 = vsel %vm688, %v695, %v697
        %v699 = vsel %vm687, %v677, %v680
        %v700 = vsel %vm690, %v686, 1326507024
        %v701 = vsel %vm689, %v683, %v700
        %v702 = vsel %vm688, %v699, %v701
        %v703 = vshll.u32 %v663, 8
        %v704 = vand.u32 %v703, 65535
        %v705 = vshrl.u32 %v703, 16
        %v706 = vand.u32 %v702, 65535
        %v707 = vshrl.u32 %v702, 16
        %v708 = vmul.u32 %v704, %v706
        %v709 = vmul.u32 %v704, %v707
        %v710 = vmul.u32 %v705, %v706
        %v711 = vmul.u32 %v705, %v707
        %v712 = vshll.u32 %v709, 16
        %v713 = vshrl.u32 %v709, 16
        %v714 = vshll.u32 %v710, 16
        %v715 = vshrl.u32 %v710, 16
        %vm716 = vc.u32 %v708, %v712
        %v717 = vsel %vm716, 1, 0
        %v718 = vadd.s32 %v708, %v712
        %v719 = vadd.s32 %v711, %v717
        %vm720 = vc.u32 %v718, %v714
        %v721 = vsel %vm720, 1, 0
        %v722 = vadd.s32 %v718, %v714
        %v723 = vadd.s32 %v719, %v721
        %v724 = vadd.s32 %v723, %v713
        %v725 = vadd.s32 %v724, %v715
        %v726 = vand.u32 %v703, 65535
        %v727 = vshrl.u32 %v703, 16
        %v728 = vand.u32 %v698, 65535
        %v729 = vshrl.u32 %v698, 16
        %v730 = vmul.u32 %v726, %v728
        %v731 = vmul.u32 %v726, %v729
        %v732 = vmul.u32 %v727, %v728
        %v733 = vmul.u32 %v727, %v729
        %v734 = vshll.u32 %v731, 16
        %v735 = vshrl.u32 %v731, 16
        %v736 = vshll.u32 %v732, 16
        %v737 = vshrl.u32 %v732, 16
        %vm738 = vc.u32 %v730, %v734
        %v739 = vsel %vm738, 1, 0
        %v740 = vadd.s32 %v730, %v734
        %v741 = vadd.s32 %v733, %v739
        %vm742 = vc.u32 %v740, %v736
        %v743 = vsel %vm742, 1, 0
        %v744 = vadd.s32 %v740, %v736
        %v745 = vadd.s32 %v741, %v743
        %v746 = vadd.s32 %v745, %v735
        %v747 = vadd.s32 %v746, %v737
        %v748 = vmul.u32 %v703, %v694
        %v749 = vadd.s32 %v725, %v744
        %vm750 = vc.u32 %v725, %v744
        %v751 = vadd.s32 %v747, 1
        %v752 = vsel %vm750, %v751, %v747
        %v753 = vadd.s32 %v748, %v752
        %v754 = vadd.s32 %v753, 536870912
        %v755 = vshrl.u32 %v754, 30
        %v756 = vshll.u32 %v755, 30
        %v757 = vsub.s32 %v753, %v756
        %vm758 = vcmp.lt.s32.totalorder %v757, 0
        %v759 = vsub.s32 0, %v757
        %v760 = vsel %vm758, %v759, %v757
        %v761 = vclz %v760
        %v762 = vsub.s32 %v761, 2
        %vm763 = vcmp.gt.s32.totalorder 0, %v762
        %v764 = vsel %vm763, 0, %v762
        %v765 = vsub.s32 32, %v764
        %v766 = vshll.u32 %v757, %v764
        %v767 = vshrl.u32 %v749, %v765
        %v768 = vor.u32 %v766, %v767
        %v769 = vsub.s32 4294967266, %v764
        %v770 = vadd.s32 %v769, 127
        %v771 = vshll.u32 %v770, 23
        %v772 = vor.u32 4788187, %v771
        %v773 = vand.u32 2147483647, %v772
        %v775 = vcvt.s32.f32 %v768
        %v776 = vmul.f32 %v775, %v773
        %v777 = vxor.u32 %v776, 2147483648
        %v778 = vsel %vm657, %v777, %v776
        %v779 = vsub.s32 4, %v755
        %v780 = vsel %vm657, %v779, %v755
        %v781 = vsel %vm656, %v499, %v778
        %v782 = vsel %vm656, 0, %v780
        %v783 = vmul.f32 %v781, %v781
        %v784 = vmul.f32 %v783, -0.001358992
        %v785 = vadd.f32 %v784, 0.041655596
        %v786 = vmul.f32 %v783, %v785
        %v787 = vadd.f32 %v786, -0.4999988
        %v788 = vmul.f32 %v783, %v787
        %v789 = vadd.f32 1.0, %v788
        %v790 = vmul.f32 %v781, %v781
        %v791 = vmul.f32 %v790, -0.00019511016
        %v792 = vadd.f32 %v791, 0.008332121
        %v793 = vmul.f32 %v790, %v792
        %v794 = vadd.f32 %v793, -0.16666654
        %v795 = vmul.f32 %v790, %v794
        %v796 = vadd.f32 %v795, 1.0
        %v797 = vmul.f32 %v796, %v781
        %vm798 = vweird.f32 %v499
        %v799 = vand.u32 %v782, 3
        %vm800 = vcmp.lt.s32.totalorder %v799, 2
        %vm801 = vcmp.eq.s32.totalorder %v799, 0
        %v802 = vxor.u32 %v797, 2147483648
        %v803 = vsel %vm801, %v789, %v802
        %vm804 = vcmp.eq.s32.totalorder %v799, 2
        %v805 = vxor.u32 %v789, 2147483648
        %v806 = vsel %vm804, %v805, %v797
        %v807 = vsel %vm800, %v803, %v806
        %v808 = vsel %vm798, nan, %v807
        %v809 = vmul.f32 %v654, 2.0
        %v810 = vmul.f32 %v809, %v808
        %v811 = vmul.f32 %v809, %v654
        %v812 = vsub.f32 1.0, %v811
        %v814 = vrot.slane %v340, 4
        %v817 = vrot.slane %v496, 4
        %v820 = vrot.slane %v654, 4
        %v823 = vrot.slane %v810, 4
        %vm825 = vcmask 1043456
        %v826 = vsel %vm825, %v170, %v814
        %v827 = vsel %vm825, %v494, %v817
        %v828 = vsel %vm825, %v498, %v820
        %v829 = vsel %vm825, %v808, %v823
        %v830 = vsel %vm825, %v812, 0.0
        %831 = vxpose.xlu0.b32.start [1/16] %v826, 128
        %832 = vxpose.xlu0.b32.cont [2/16] %v827, 128
        %833 = vxpose.xlu0.b32.cont [3/16] %v828, 128
        %834 = vxpose.xlu0.b32.cont [4/16] %v829, 128
        %835 = vxpose.xlu0.b32.cont [5/16] %v830, 128
        %836 = vxpose.xlu0.b32.cont [6/16] 0.0, 128
        %837 = vxpose.xlu0.b32.cont [7/16] 0.0, 128
        %838 = vxpose.xlu0.b32.cont [8/16] 0.0, 128
        %839 = vxpose.xlu0.b32.cont [9/16] 0.0, 128
        %840 = vxpose.xlu0.b32.cont [10/16] 0.0, 128
        %841 = vxpose.xlu0.b32.cont [11/16] 0.0, 128
        %842 = vxpose.xlu0.b32.cont [12/16] 0.0, 128
        %843 = vxpose.xlu0.b32.cont [13/16] 0.0, 128
        %844 = vxpose.xlu0.b32.cont [14/16] 0.0, 128
        %845 = vxpose.xlu0.b32.cont [15/16] 0.0, 128
        %846 = vxpose.xlu0.b32.end [16/16] 0.0, 128
        %v847 = vpop.trf.xlu0
        %v848 = vpop.trf.xlu0
        %v849 = vpop.trf.xlu0
        %v850 = vpop.trf.xlu0
        %v851 = vpop.trf.xlu0
        %v852 = vpop.trf.xlu0
        %v853 = vpop.trf.xlu0
        %v854 = vpop.trf.xlu0
        %v855 = vpop.trf.xlu0
        %v856 = vpop.trf.xlu0
        %v857 = vpop.trf.xlu0
        %v858 = vpop.trf.xlu0
        %v859 = vpop.trf.xlu0
        %v860 = vpop.trf.xlu0
        %v861 = vpop.trf.xlu0
        %v862 = vpop.trf.xlu0
        %vm863 = vcmask 293888
        %864 = vst.msk [vmem:[%s118] sm:$0xff] %vm863, %v847
        %865 = vst.msk [vmem:[%s118 + $0x8] sm:$0xff] %vm863, %v848
        %866 = vst.msk [vmem:[%s118 + $0x10] sm:$0xff] %vm863, %v849
        %867 = vst.msk [vmem:[%s118 + $0x18] sm:$0xff] %vm863, %v850
        %868 = vst.msk [vmem:[%s118 + $0x20] sm:$0xff] %vm863, %v851
        %869 = vst.msk [vmem:[%s118 + $0x28] sm:$0xff] %vm863, %v852
        %870 = vst.msk [vmem:[%s118 + $0x30] sm:$0xff] %vm863, %v853
        %871 = vst.msk [vmem:[%s118 + $0x38] sm:$0xff] %vm863, %v854
        %872 = vst.msk [vmem:[%s118 + $0x40] sm:$0xff] %vm863, %v855
        %873 = vst.msk [vmem:[%s118 + $0x48] sm:$0xff] %vm863, %v856
        %874 = vst.msk [vmem:[%s118 + $0x50] sm:$0xff] %vm863, %v857
        %875 = vst.msk [vmem:[%s118 + $0x58] sm:$0xff] %vm863, %v858
        %876 = vst.msk [vmem:[%s118 + $0x60] sm:$0xff] %vm863, %v859
        %877 = vst.msk [vmem:[%s118 + $0x68] sm:$0xff] %vm863, %v860
        %878 = vst.msk [vmem:[%s118 + $0x70] sm:$0xff] %vm863, %v861
        %879 = vst.msk [vmem:[%s118 + $0x78] sm:$0xff] %vm863, %v862
        %s880 = sand.u32 %s46, 1
        %s881 = sand.u32 %s46, 1
        %s882 = smul.addr %s881, 128
        %s883 = scalar_lea.vmem [#allocation2], %s882
        // Predicated region
        $region25: #{tpu_custom_call.1} parent=23 // pred_check
          %p884 = pneg %p56
        $region26: #{tpu_custom_call.1} parent=23 // pred_check_branch
          %886 = sbr.rel (%p884) target = $region28
        $region27: #{tpu_custom_call.1} parent=23 // pred_region
          %s887 = smul.u32 16, %s12
          %s888 = ssub.s32 75, %s887
          %p889 = scmp.lt.s32.totalorder %s888, 16
          %s890 = scalar_select %p889, %s888, 16
          %s891 = smul.u32 8, %s890
          %p892 = scmp.ne.s32.totalorder 0, %s891
          %s893 = smul.addr %s887, 8
          %s894 = scalar_lea.vmem %s1, %s893
          // Predicated region
          $region29: #{tpu_custom_call.1} parent=27 // pred_check
            %p895 = pneg %p892
          $region30: #{tpu_custom_call.1} parent=27 // pred_check_branch
            %897 = sbr.rel (%p895) target = $region32
          $region31: #{tpu_custom_call.1} parent=27 // pred_region
            // Predicated region
            $region33: #{tpu_custom_call.1} parent=31 // pred_check
              _
            $region34: #{tpu_custom_call.1} parent=31 // pred_check_branch
              %899 = sbr.rel (0) target = $region36
            $region35: #{tpu_custom_call.1} parent=31 // pred_region
              // Predicated region
              $region55: #{tpu_custom_call.1} parent=35 // pred_check
                _
              $region56: #{tpu_custom_call.1} parent=35 // pred_check_branch
                %979 = sbr.rel (0) target = $region58
              $region57: #{tpu_custom_call.1} parent=35 // pred_region
                %s980 = sshrl.u32 %s890, 4
                // While loop
                $region59: #{tpu_custom_call.1} parent=57 // loop_pre_header
                  _
                $region60: #{tpu_custom_call.1} parent=57 // loop_header
                  %s982 = sphi 0, %s984
                  %p983 = scmp.ge.s32.totalorder %s982, %s980
                  %s987 = sphi 0, %s1024
                  %s988 = sphi %s883, %s1027
                  %s989 = sphi %s894, %s1028
                $region61: #{tpu_custom_call.1} parent=57 // loop_header_branch
                  %986 = sbr.rel (%p983) target = $region65
                $region62: #{tpu_custom_call.1} parent=57 // loop_body
                  %v990 = vld [vmem:[%s988] sm:$0xff]
                  %991 = vst [vmem:[%s989] sm:$0xff] %v990
                  %v992 = vld [vmem:[%s988 + $0x8] sm:$0xff]
                  %993 = vst [vmem:[%s989 + $0x8] sm:$0xff] %v992
                  %v994 = vld [vmem:[%s988 + $0x10] sm:$0xff]
                  %995 = vst [vmem:[%s989 + $0x10] sm:$0xff] %v994
                  %v996 = vld [vmem:[%s988 + $0x18] sm:$0xff]
                  %997 = vst [vmem:[%s989 + $0x18] sm:$0xff] %v996
                  %v998 = vld [vmem:[%s988 + $0x20] sm:$0xff]
                  %999 = vst [vmem:[%s989 + $0x20] sm:$0xff] %v998
                  %v1000 = vld [vmem:[%s988 + $0x28] sm:$0xff]
                  %1001 = vst [vmem:[%s989 + $0x28] sm:$0xff] %v1000
                  %v1002 = vld [vmem:[%s988 + $0x30] sm:$0xff]
                  %1003 = vst [vmem:[%s989 + $0x30] sm:$0xff] %v1002
                  %v1004 = vld [vmem:[%s988 + $0x38] sm:$0xff]
                  %1005 = vst [vmem:[%s989 + $0x38] sm:$0xff] %v1004
                  %v1006 = vld [vmem:[%s988 + $0x40] sm:$0xff]
                  %1007 = vst [vmem:[%s989 + $0x40] sm:$0xff] %v1006
                  %v1008 = vld [vmem:[%s988 + $0x48] sm:$0xff]
                  %1009 = vst [vmem:[%s989 + $0x48] sm:$0xff] %v1008
                  %v1010 = vld [vmem:[%s988 + $0x50] sm:$0xff]
                  %1011 = vst [vmem:[%s989 + $0x50] sm:$0xff] %v1010
                  %v1012 = vld [vmem:[%s988 + $0x58] sm:$0xff]
                  %1013 = vst [vmem:[%s989 + $0x58] sm:$0xff] %v1012
                  %v1014 = vld [vmem:[%s988 + $0x60] sm:$0xff]
                  %1015 = vst [vmem:[%s989 + $0x60] sm:$0xff] %v1014
                  %v1016 = vld [vmem:[%s988 + $0x68] sm:$0xff]
                  %1017 = vst [vmem:[%s989 + $0x68] sm:$0xff] %v1016
                  %v1018 = vld [vmem:[%s988 + $0x70] sm:$0xff]
                  %1019 = vst [vmem:[%s989 + $0x70] sm:$0xff] %v1018
                  %v1020 = vld [vmem:[%s988 + $0x78] sm:$0xff]
                  %1021 = vst [vmem:[%s989 + $0x78] sm:$0xff] %v1020
                  %s1022 = sadd.s32 1, %s987
                  %p1023 = scmp.ge.s32.totalorder %s1022, %s980
                  %s1024 = scalar_select %p1023, 0, %s1022
                  %s1025 = smul.u32 %s1024, 128
                  %s1026 = smul.u32 %s1024, 128
                  %s1027 = scalar_lea.vmem %s883, %s1025 [#allocation2]
                  %s1028 = scalar_lea.vmem %s894, %s1026
                $region63: #{tpu_custom_call.1} parent=57 // loop_footer
                  %s984 = sadd.s32 %s982, 1
                $region64: #{tpu_custom_call.1} parent=57 // loop_footer_branch
                  %981 = sbr.rel target = $region60
                $region65: #{tpu_custom_call.1} parent=57 // loop_exit
                  _
                %s1029 = sshrl.u32 %s890, 4
                %s1030 = sand.u32 %s890, 15
                %s1031 = smul.u32 %s1029, 16
                %s1032 = smul.u32 8, %s1031
                %s1033 = scalar_lea.vmem %s883, %s1032 [#allocation2]
                %s1034 = smul.u32 8, %s1031
                %s1035 = scalar_lea.vmem %s894, %s1034
                // While loop
                $region66: #{tpu_custom_call.1} parent=57 // loop_pre_header
                  _
                $region67: #{tpu_custom_call.1} parent=57 // loop_header
                  %s1037 = sphi 0, %s1039
                  %p1038 = scmp.ge.s32.totalorder %s1037, %s1030
                  %s1042 = sphi 0, %s1049
                  %s1043 = sphi %s1033, %s1052
                  %s1044 = sphi %s1035, %s1053
                $region68: #{tpu_custom_call.1} parent=57 // loop_header_branch
                  %1041 = sbr.rel (%p1038) target = $region72
                $region69: #{tpu_custom_call.1} parent=57 // loop_body
                  %v1045 = vld [vmem:[%s1043] sm:$0xff]
                  %1046 = vst [vmem:[%s1044] sm:$0xff] %v1045
                  %s1047 = sadd.s32 1, %s1042
                  %p1048 = scmp.ge.s32.totalorder %s1047, %s1030
                  %s1049 = scalar_select %p1048, 0, %s1047
                  %s1050 = smul.u32 %s1049, 8
                  %s1051 = smul.u32 %s1049, 8
                  %s1052 = scalar_lea.vmem %s1033, %s1050 [#allocation2]
                  %s1053 = scalar_lea.vmem %s1035, %s1051
                $region70: #{tpu_custom_call.1} parent=57 // loop_footer
                  %s1039 = sadd.s32 %s1037, 1
                $region71: #{tpu_custom_call.1} parent=57 // loop_footer_branch
                  %1036 = sbr.rel target = $region67
                $region72: #{tpu_custom_call.1} parent=57 // loop_exit
                  _
              $region58: #{tpu_custom_call.1} parent=35 // pred_fallthru
                _
              // Predicated region
              $region73: #{tpu_custom_call.1} parent=35 // pred_check
                _
              $region74: #{tpu_custom_call.1} parent=35 // pred_check_branch
                %1055 = sbr.rel target = $region76
              $region75: #{tpu_custom_call.1} parent=35 // pred_region
                _
              $region76: #{tpu_custom_call.1} parent=35 // pred_fallthru
                _
            $region36: #{tpu_custom_call.1} parent=31 // pred_fallthru
              _
            // Predicated region
            $region37: #{tpu_custom_call.1} parent=31 // pred_check
              _
            $region38: #{tpu_custom_call.1} parent=31 // pred_check_branch
              %901 = sbr.rel target = $region40
            $region39: #{tpu_custom_call.1} parent=31 // pred_region
              %s903 = ssub.s32 256, 1
              %s904 = sshrl.u32 %s890, 4
              // While loop
              $region41: #{tpu_custom_call.1} parent=39 // loop_pre_header
                _
              $region42: #{tpu_custom_call.1} parent=39 // loop_header
                %s906 = sphi 0, %s908
                %p907 = scmp.ge.s32.totalorder %s906, %s904
                %s911 = sphi 0, %s948
                %s912 = sphi %s883, %s951
                %s913 = sphi %s894, %s952
              $region43: #{tpu_custom_call.1} parent=39 // loop_header_branch
                %910 = sbr.rel (%p907) target = $region47
              $region44: #{tpu_custom_call.1} parent=39 // loop_body
                %v914 = vld [vmem:[%s912] sm:%s903]
                %915 = vst [vmem:[%s913] sm:%s903] %v914
                %v916 = vld [vmem:[%s912 + $0x8] sm:%s903]
                %917 = vst [vmem:[%s913 + $0x8] sm:%s903] %v916
                %v918 = vld [vmem:[%s912 + $0x10] sm:%s903]
                %919 = vst [vmem:[%s913 + $0x10] sm:%s903] %v918
                %v920 = vld [vmem:[%s912 + $0x18] sm:%s903]
                %921 = vst [vmem:[%s913 + $0x18] sm:%s903] %v920
                %v922 = vld [vmem:[%s912 + $0x20] sm:%s903]
                %923 = vst [vmem:[%s913 + $0x20] sm:%s903] %v922
                %v924 = vld [vmem:[%s912 + $0x28] sm:%s903]
                %925 = vst [vmem:[%s913 + $0x28] sm:%s903] %v924
                %v926 = vld [vmem:[%s912 + $0x30] sm:%s903]
                %927 = vst [vmem:[%s913 + $0x30] sm:%s903] %v926
                %v928 = vld [vmem:[%s912 + $0x38] sm:%s903]
                %929 = vst [vmem:[%s913 + $0x38] sm:%s903] %v928
                %v930 = vld [vmem:[%s912 + $0x40] sm:%s903]
                %931 = vst [vmem:[%s913 + $0x40] sm:%s903] %v930
                %v932 = vld [vmem:[%s912 + $0x48] sm:%s903]
                %933 = vst [vmem:[%s913 + $0x48] sm:%s903] %v932
                %v934 = vld [vmem:[%s912 + $0x50] sm:%s903]
                %935 = vst [vmem:[%s913 + $0x50] sm:%s903] %v934
                %v936 = vld [vmem:[%s912 + $0x58] sm:%s903]
                %937 = vst [vmem:[%s913 + $0x58] sm:%s903] %v936
                %v938 = vld [vmem:[%s912 + $0x60] sm:%s903]
                %939 = vst [vmem:[%s913 + $0x60] sm:%s903] %v938
                %v940 = vld [vmem:[%s912 + $0x68] sm:%s903]
                %941 = vst [vmem:[%s913 + $0x68] sm:%s903] %v940
                %v942 = vld [vmem:[%s912 + $0x70] sm:%s903]
                %943 = vst [vmem:[%s913 + $0x70] sm:%s903] %v942
                %v944 = vld [vmem:[%s912 + $0x78] sm:%s903]
                %945 = vst [vmem:[%s913 + $0x78] sm:%s903] %v944
                %s946 = sadd.s32 1, %s911
                %p947 = scmp.ge.s32.totalorder %s946, %s904
                %s948 = scalar_select %p947, 0, %s946
                %s949 = smul.u32 %s948, 128
                %s950 = smul.u32 %s948, 128
                %s951 = scalar_lea.vmem %s883, %s949 [#allocation2]
                %s952 = scalar_lea.vmem %s894, %s950
              $region45: #{tpu_custom_call.1} parent=39 // loop_footer
                %s908 = sadd.s32 %s906, 1
              $region46: #{tpu_custom_call.1} parent=39 // loop_footer_branch
                %905 = sbr.rel target = $region42
              $region47: #{tpu_custom_call.1} parent=39 // loop_exit
                _
              %s953 = sshrl.u32 %s890, 4
              %s954 = sand.u32 %s890, 15
              %s955 = smul.u32 %s953, 16
              %s956 = smul.u32 8, %s955
              %s957 = scalar_lea.vmem %s883, %s956 [#allocation2]
              %s958 = smul.u32 8, %s955
              %s959 = scalar_lea.vmem %s894, %s958
              // While loop
              $region48: #{tpu_custom_call.1} parent=39 // loop_pre_header
                _
              $region49: #{tpu_custom_call.1} parent=39 // loop_header
                %s961 = sphi 0, %s963
                %p962 = scmp.ge.s32.totalorder %s961, %s954
                %s966 = sphi 0, %s973
                %s967 = sphi %s957, %s976
                %s968 = sphi %s959, %s977
              $region50: #{tpu_custom_call.1} parent=39 // loop_header_branch
                %965 = sbr.rel (%p962) target = $region54
              $region51: #{tpu_custom_call.1} parent=39 // loop_body
                %v969 = vld [vmem:[%s967] sm:%s903]
                %970 = vst [vmem:[%s968] sm:%s903] %v969
                %s971 = sadd.s32 1, %s966
                %p972 = scmp.ge.s32.totalorder %s971, %s954
                %s973 = scalar_select %p972, 0, %s971
                %s974 = smul.u32 %s973, 8
                %s975 = smul.u32 %s973, 8
                %s976 = scalar_lea.vmem %s957, %s974 [#allocation2]
                %s977 = scalar_lea.vmem %s959, %s975
              $region52: #{tpu_custom_call.1} parent=39 // loop_footer
                %s963 = sadd.s32 %s961, 1
              $region53: #{tpu_custom_call.1} parent=39 // loop_footer_branch
                %960 = sbr.rel target = $region49
              $region54: #{tpu_custom_call.1} parent=39 // loop_exit
                _
            $region40: #{tpu_custom_call.1} parent=31 // pred_fallthru
              _
          $region32: #{tpu_custom_call.1} parent=27 // pred_fallthru
            _
          %1056 = vnop
        $region28: #{tpu_custom_call.1} parent=23 // pred_fallthru
          _
      $region24: #{tpu_custom_call.1} parent=5 // pred_fallthru
        _
      %p1057 = scmp.le.s32.totalorder 2, %s7
      // Predicated region
      $region77: #{tpu_custom_call.1} parent=5 // pred_check
        %p1058 = pneg %p1057
      $region78: #{tpu_custom_call.1} parent=5 // pred_check_branch
        %1060 = sbr.rel (%p1058) target = $region80
      $region79: #{tpu_custom_call.1} parent=5 // pred_region
        %s1061 = ssub.s32 %s7, 2
        // Predicated region
        $region81: #{tpu_custom_call.1} parent=79 // pred_check
          %p1062 = pneg %p62
        $region82: #{tpu_custom_call.1} parent=79 // pred_check_branch
          %1064 = sbr.rel (%p1062) target = $region84
        $region83: #{tpu_custom_call.1} parent=79 // pred_region
          %s1065 = sand.u32 %s47, 1
          %s1066 = sand.u32 %s47, 1
          %s1067 = smul.addr %s1066, 128
          %s1068 = scalar_lea.vmem [#allocation2], %s1067
        $region84: #{tpu_custom_call.1} parent=79 // pred_fallthru
          _
      $region80: #{tpu_custom_call.1} parent=5 // pred_fallthru
        _
    $region6: #{tpu_custom_call.1} parent=1 // loop_footer
      %s11 = sadd.s32 1, %s7
    $region7: #{tpu_custom_call.1} parent=1 // loop_footer_branch
      %6 = sbr.rel target = $region3
    $region8: #{tpu_custom_call.1} parent=1 // loop_exit
      _

</llo_original>
